<compile_context>
chip_gen: v7x
topology: tpu7x:2x2x1
jax: 0.10.0
libtpu: 0.0.40
codegen_flags: <defaults>
</compile_context>

<pallas_src>
import jax
import jax.numpy as jnp
import numpy as np
from jax.experimental import pallas as pl
from jax.experimental.pallas import tpu as pltpu


def _round_up(v, m):
    return (v + m - 1) // m * m


# --------------------------------------------------------------------------
# Softmax cross-entropy branch: streaming online log-sum-exp over class tiles.
# grid = (row blocks ["parallel"], class blocks ["arbitrary", innermost]).
# --------------------------------------------------------------------------
def _softmax_ce_kernel(x_ref, label_ref, w_ref, b_ref,      # inputs
                       loss_ref, corr_ref,                   # outputs
                       m_sc, l_sc, t_sc):                    # scratch
    c = pl.program_id(1)
    nc = pl.num_programs(1)
    tC = w_ref.shape[0]

    @pl.when(c == 0)
    def _():
        m_sc[...] = jnp.full_like(m_sc, -jnp.inf)
        l_sc[...] = jnp.zeros_like(l_sc)
        t_sc[...] = jnp.zeros_like(t_sc)

    # logits tile on the MXU: bf16 x bf16 -> f32 accumulation.
    s = jax.lax.dot_general(
        x_ref[...], w_ref[...], (((1,), (1,)), ((), ())),
        preferred_element_type=jnp.float32)                  # (tN, tC)
    s = s + b_ref[...]                                       # bias is f32

    # Tile-local class index (0..tC-1).  Shift the label instead of the full
    # (tN, tC) iota -> one fewer full-tile VALU pass per class tile.
    cls = jax.lax.broadcasted_iota(jnp.int32, s.shape, 1)
    labels_rel = label_ref[...] - c * tC                     # (tN, 1) int32

    # online log-sum-exp
    tile_max = jnp.max(s, axis=-1, keepdims=True)            # (tN, 1)
    m_prev = m_sc[...]
    m_new = jnp.maximum(m_prev, tile_max)
    l_sc[...] = (jnp.exp(m_prev - m_new) * l_sc[...]
                 + jnp.sum(jnp.exp(s - m_new), axis=-1, keepdims=True))
    m_sc[...] = m_new

    # true-class logit (label falls in exactly one class tile); no one-hot.
    t_sc[...] += jnp.sum(jnp.where(cls == labels_rel, s, 0.0),
                         axis=-1, keepdims=True)

    @pl.when(c == nc - 1)
    def _():
        loss_ref[...] = m_sc[...] + jnp.log(l_sc[...]) - t_sc[...]
        # top-1 correct <=> the true-class logit equals the global max.
        # (Differs from torch.argmax only on exact float ties.)
        corr_ref[...] = (t_sc[...] >= m_sc[...]).astype(jnp.float32)

    # TODO(synk): the PyTorch module's isnan/isinf debug print has no clean
    # in-kernel equivalent; the loss value itself is computed identically.


# --------------------------------------------------------------------------
# Angular prototypical branch (tiny: (B, B) similarity matrix).
# --------------------------------------------------------------------------
def _make_angleproto_kernel(b_valid):
    def kernel(pos_ref, anc_ref, w_ref, b_ref, loss_ref):
        pos = pos_ref[...]                                   # (B_pad, D_pad) f32
        anc = anc_ref[...]
        # rsqrt on the EUP; normalizing before the matmul avoids the extra
        # (B, B) divides / relayout of the divide formulation.
        inv_pn = jax.lax.rsqrt(
            jnp.maximum(jnp.sum(pos * pos, axis=-1, keepdims=True), 1e-16))
        inv_an = jax.lax.rsqrt(
            jnp.maximum(jnp.sum(anc * anc, axis=-1, keepdims=True), 1e-16))
        cos = jax.lax.dot_general(
            pos * inv_pn, anc * inv_an, (((1,), (1,)), ((), ())),
            preferred_element_type=jnp.float32)              # (B_pad, B_pad)
        s = cos * w_ref[0, 0] + b_ref[0, 0]

        bp = s.shape[0]
        ri = jax.lax.broadcasted_iota(jnp.int32, (bp, bp), 0)
        ci = jax.lax.broadcasted_iota(jnp.int32, (bp, bp), 1)
        s = jnp.where(ci < b_valid, s, -1e30)                # mask padded cols

        rmax = jnp.max(s, axis=-1, keepdims=True)
        lse = rmax + jnp.log(jnp.sum(jnp.exp(s - rmax), axis=-1, keepdims=True))
        diag = jnp.sum(jnp.where(ri == ci, s, 0.0), axis=-1, keepdims=True)
        loss_ref[...] = lse - diag                           # (B_pad, 1); padded
        #                                                      rows sliced away
    return kernel


# --------------------------------------------------------------------------
# One-time parameter preparation (do NOT call this inside the training step).
# --------------------------------------------------------------------------
def pad_classifier_params(fc_weight, fc_bias, tile_c=None):
    """Pad/cast the classifier once: W -> bf16 lane-dense, bias -> f32 with
    -1e30 in padded classes (never affects LSE / top-1)."""
    C, D = fc_weight.shape
    D_pad = _round_up(D, 128)
    C128 = _round_up(C, 128)
    if tile_c is not None:
        tC = tile_c
    elif C128 <= 2048:
        # whole W fits comfortably in VMEM -> hold it resident (DMA'd once).
        tC = C128
    else:
        tC = 1024                      # streamed class tiles
    C_pad = _round_up(C, tC)
    Wp = jnp.pad(fc_weight.astype(jnp.bfloat16),
                 ((0, C_pad - C), (0, D_pad - D)))
    bias_p = jnp.pad(fc_bias.astype(jnp.float32), (0, C_pad - C),
                     constant_values=-1e30).reshape(1, C_pad)
    return Wp, bias_p, tC


# --------------------------------------------------------------------------
# Loss wrapper (per-step call)
# --------------------------------------------------------------------------
def softmax_prototypical_loss(x, label, Wp, bias_p, tC, w_scale, b_bias):
    B, M, D = x.shape
    N = B * M
    C_pad, D_pad = Wp.shape
    assert D <= D_pad and C_pad % tC == 0

    # ---- row tiling: big tiles, but keep >= 2 row blocks when N allows it
    # (so the "parallel" row axis can shard across v7x's two TensorCores). ---
    N16 = _round_up(N, 16)
    if N16 >= 512:
        tN = 256
    elif N16 >= 32:
        tN = _round_up(N16 // 2, 16)
    else:
        tN = N16
    N_pad = _round_up(N, tN)

    xf = jnp.pad(x.reshape(N, D).astype(jnp.bfloat16),
                 ((0, N_pad - N), (0, D_pad - D)))
    labels = jnp.pad(label.reshape(N).astype(jnp.int32),
                     (0, N_pad - N)).reshape(N_pad, 1)

    grid = (N_pad // tN, C_pad // tC)
    loss_rows, corr_rows = pl.pallas_call(
        _softmax_ce_kernel,
        out_shape=(jax.ShapeDtypeStruct((N_pad, 1), jnp.float32),
                   jax.ShapeDtypeStruct((N_pad, 1), jnp.float32)),
        grid_spec=pltpu.PrefetchScalarGridSpec(
            num_scalar_prefetch=0,
            grid=grid,
            in_specs=[
                pl.BlockSpec((tN, D_pad), lambda i, c: (i, 0)),   # x rows (bf16)
                pl.BlockSpec((tN, 1), lambda i, c: (i, 0)),       # labels
                pl.BlockSpec((tC, D_pad), lambda i, c: (c, 0)),   # W tile (bf16)
                pl.BlockSpec((1, tC), lambda i, c: (0, c)),       # bias tile
            ],
            out_specs=(pl.BlockSpec((tN, 1), lambda i, c: (i, 0)),
                       pl.BlockSpec((tN, 1), lambda i, c: (i, 0))),
            scratch_shapes=[pltpu.VMEM((tN, 1), jnp.float32),   # running max
                            pltpu.VMEM((tN, 1), jnp.float32),   # running sum
                            pltpu.VMEM((tN, 1), jnp.float32)],  # true logit
        ),
        compiler_params=pltpu.CompilerParams(
            dimension_semantics=("parallel", "arbitrary"),
            vmem_limit_bytes=40 * 1024 * 1024),
    )(xf, labels, Wp, bias_p)

    # tiny final reductions in the wrapper; padded rows sliced away.
    nlossS = jnp.sum(loss_rows[:N, 0]) / N
    prec1 = 100.0 * jnp.sum(corr_rows[:N, 0]) / N

    # ---- angular prototypical branch (small (B, B) problem, f32) ----------
    pos = x[:, 0, :].astype(jnp.float32)
    anc = jnp.mean(x[:, 1:, :].astype(jnp.float32), axis=1)   # NaN if M == 1,
    #                                                           same as PyTorch
    B_pad = _round_up(B, 8)
    D_pad_a = _round_up(D, 128)
    pos_p = jnp.pad(pos, ((0, B_pad - B), (0, D_pad_a - D)))
    anc_p = jnp.pad(anc, ((0, B_pad - B), (0, D_pad_a - D)))
    w2 = jnp.asarray(w_scale, jnp.float32).reshape(1, 1)
    b2 = jnp.asarray(b_bias, jnp.float32).reshape(1, 1)

    per_row = pl.pallas_call(
        _make_angleproto_kernel(B),
        out_shape=jax.ShapeDtypeStruct((B_pad, 1), jnp.float32),
        in_specs=[
            pl.BlockSpec(memory_space=pltpu.MemorySpace.VMEM),   # pos
            pl.BlockSpec(memory_space=pltpu.MemorySpace.VMEM),   # anchor
            pl.BlockSpec(memory_space=pltpu.MemorySpace.SMEM),   # w scale
            pl.BlockSpec(memory_space=pltpu.MemorySpace.SMEM),   # b offset
        ],
        out_specs=pl.BlockSpec(memory_space=pltpu.MemorySpace.VMEM),
    )(pos_p, anc_p, w2, b2)
    nlossP = jnp.sum(per_row[:B, 0]) / B

    return nlossS + nlossP, prec1


# --------------------------------------------------------------------------
# Pure-JAX reference (mirrors the PyTorch module)
# --------------------------------------------------------------------------
def _reference(x, label, fc_weight, fc_bias, w_scale, b_bias, cast_bf16=False):
    hi = jax.lax.Precision.HIGHEST
    B, M, D = x.shape
    N = B * M
    xf = x.reshape(N, D)
    Wf = fc_weight
    if cast_bf16:   # mimic the kernel's bf16 input cast (f32 accumulation)
        xf = xf.astype(jnp.bfloat16).astype(jnp.float32)
        Wf = Wf.astype(jnp.bfloat16).astype(jnp.float32)
    lf = label.reshape(N)
    logits = jnp.matmul(xf, Wf.T, precision=hi) + fc_bias
    lse = jax.scipy.special.logsumexp(logits, axis=-1)
    nlossS = jnp.mean(lse - logits[jnp.arange(N), lf])
    pred = jnp.argmax(logits, axis=-1)
    prec1 = 100.0 * jnp.mean((pred == lf).astype(jnp.float32))

    pos = x[:, 0, :]
    anc = jnp.mean(x[:, 1:, :], axis=1)
    dots = jnp.matmul(pos, anc.T, precision=hi)
    denom = jnp.maximum(
        jnp.linalg.norm(pos, axis=-1, keepdims=True)
        * jnp.linalg.norm(anc, axis=-1, keepdims=True).T, 1e-8)
    s = dots / denom * w_scale + b_bias
    lse2 = jax.scipy.special.logsumexp(s, axis=-1)
    nlossP = jnp.mean(lse2 - jnp.diag(s))
    return nlossS + nlossP, prec1


if __name__ == "__main__":
    # speakers, utts/speaker, embed dim, classes.
    B, M, D, C = 10, 3, 32, 200

    key = jax.random.PRNGKey(0)
    kx, kl, kw, kb = jax.random.split(key, 4)
    x = jax.random.normal(kx, (B, M, D), dtype=jnp.float32)
    label = jax.random.randint(kl, (B, M), 0, C, dtype=jnp.int32)

    # Deterministic synthetic parameters (not a checkpoint load).
    fc_weight = 0.1 * jax.random.normal(kw, (C, D), dtype=jnp.float32)
    fc_bias = 0.01 * jax.random.normal(kb, (C,), dtype=jnp.float32)
    w_scale = jnp.float32(10.0)   # angleproto init_w
    b_bias = jnp.float32(-5.0)    # angleproto init_b

    # One-time parameter prep.  tile_c=128 forces 2 class tiles so the
    # streaming online-LSE path is exercised; the default policy would hold
    # the whole (padded) W resident for C=200.
    Wp, bias_p, tC = pad_classifier_params(fc_weight, fc_bias, tile_c=128)

    loss, prec1 = softmax_prototypical_loss(
        x, label, Wp, bias_p, tC, w_scale, b_bias)
    jax.block_until_ready((loss, prec1))

    # Matched-precision reference (bf16-cast inputs like the kernel) -> tight.
    ref_loss_bf, ref_prec1_bf = _reference(
        x, label, fc_weight, fc_bias, w_scale, b_bias, cast_bf16=True)
    # Full-f32 reference (mirrors PyTorch exactly) -> loose, bf16 cast effect.
    ref_loss, _ = _reference(
        x, label, fc_weight, fc_bias, w_scale, b_bias, cast_bf16=False)

    np.testing.assert_allclose(np.asarray(loss), np.asarray(ref_loss_bf),
                               rtol=1e-3, atol=1e-3)
    np.testing.assert_allclose(np.asarray(loss), np.asarray(ref_loss),
                               rtol=3e-2, atol=3e-2)
    # allow at most one top-1 flip out of N=30 rows (bf16 near-ties).
    np.testing.assert_allclose(np.asarray(prec1), np.asarray(ref_prec1_bf),
                               rtol=0.0, atol=3.4)

    print("KERNEL_OK")
</pallas_src>

<mosaic_0001>
module attributes {stable_mosaic.version = 11 : i64} {
  func.func @_softmax_ce_kernel(%arg0: i32, %arg1: i32, %arg2: memref<16x128xbf16, #tpu.memory_space<vmem>>, %arg3: memref<16x1xi32, #tpu.memory_space<vmem>>, %arg4: memref<128x128xbf16, #tpu.memory_space<vmem>>, %arg5: memref<1x128xf32, #tpu.memory_space<vmem>>, %arg6: memref<16x1xf32, #tpu.memory_space<vmem>>, %arg7: memref<16x1xf32, #tpu.memory_space<vmem>>, %arg8: memref<16x1xf32, #tpu.memory_space<vmem>>, %arg9: memref<16x1xf32, #tpu.memory_space<vmem>>, %arg10: memref<16x1xf32, #tpu.memory_space<vmem>>) attributes {dimension_semantics = [#tpu.dimension_semantics<parallel>, #tpu.dimension_semantics<arbitrary>], iteration_bounds = array<i64: 2, 2>, scalar_prefetch = 0 : i64, scratch_operands = 3 : i64, tpu.core_type = #tpu.core_type<tc>, window_params = [{transform_indices = @transform_0, window_bounds = array<i64: 16, 128>}, {transform_indices = @transform_1, window_bounds = array<i64: 16, 1>}, {transform_indices = @transform_2, window_bounds = array<i64: 128, 128>}, {transform_indices = @transform_3, window_bounds = array<i64: 1, 128>}, {transform_indices = @transform_4, window_bounds = array<i64: 16, 1>}, {transform_indices = @transform_5, window_bounds = array<i64: 16, 1>}]} {
    %c0_i32 = arith.constant 0 : i32
    %0 = arith.cmpi eq, %arg1, %c0_i32 : i32
    %1 = arith.extui %0 : i1 to i32
    %c0_i32_0 = arith.constant 0 : i32
    %2 = arith.cmpi ne, %1, %c0_i32_0 : i32
    scf.if %2 {
      %cst_25 = arith.constant 0xFF800000 : f32
      %42 = vector.broadcast %cst_25 : f32 to vector<16x1xf32>
      %c0_26 = arith.constant 0 : index
      %c0_27 = arith.constant 0 : index
      %43 = vector.load %arg8[%c0_26, %c0_27] : memref<16x1xf32, #tpu.memory_space<vmem>>, vector<16x1xf32>
      tpu.vector_store %arg8[%c0_26, %c0_27], %42 {strides = array<i32>} : memref<16x1xf32, #tpu.memory_space<vmem>>, vector<16x1xf32>,
      %cst_28 = arith.constant 0.000000e+00 : f32
      %44 = vector.broadcast %cst_28 : f32 to vector<16x1xf32>
      %c0_29 = arith.constant 0 : index
      %c0_30 = arith.constant 0 : index
      %45 = vector.load %arg9[%c0_29, %c0_30] : memref<16x1xf32, #tpu.memory_space<vmem>>, vector<16x1xf32>
      tpu.vector_store %arg9[%c0_29, %c0_30], %44 {strides = array<i32>} : memref<16x1xf32, #tpu.memory_space<vmem>>, vector<16x1xf32>,
      %cst_31 = arith.constant 0.000000e+00 : f32
      %46 = vector.broadcast %cst_31 : f32 to vector<16x1xf32>
      %c0_32 = arith.constant 0 : index
      %c0_33 = arith.constant 0 : index
      %47 = vector.load %arg10[%c0_32, %c0_33] : memref<16x1xf32, #tpu.memory_space<vmem>>, vector<16x1xf32>
      tpu.vector_store %arg10[%c0_32, %c0_33], %46 {strides = array<i32>} : memref<16x1xf32, #tpu.memory_space<vmem>>, vector<16x1xf32>,
    } else {
    }
    %c0 = arith.constant 0 : index
    %c0_1 = arith.constant 0 : index
    %3 = vector.load %arg2[%c0, %c0_1] : memref<16x128xbf16, #tpu.memory_space<vmem>>, vector<16x128xbf16>
    %c0_2 = arith.constant 0 : index
    %c0_3 = arith.constant 0 : index
    %4 = vector.load %arg4[%c0_2, %c0_3] : memref<128x128xbf16, #tpu.memory_space<vmem>>, vector<128x128xbf16>
    %cst = arith.constant dense<0.000000e+00> : vector<16x128xf32>
    %5 = tpu.matmul %3, %4, %cst {dimension_numbers = #tpu.dot_dimension_numbers<[1], [1], [0], [0], [0, 0, 1, 0], [], []>} : vector<16x128xbf16>, vector<128x128xbf16>, vector<16x128xf32> -> vector<16x128xf32>
    %c0_4 = arith.constant 0 : index
    %c0_5 = arith.constant 0 : index
    %6 = vector.load %arg5[%c0_4, %c0_5] : memref<1x128xf32, #tpu.memory_space<vmem>>, vector<1x128xf32>
    %7 = vector.broadcast %6 : vector<1x128xf32> to vector<16x128xf32>
    %8 = arith.addf %5, %7 : vector<16x128xf32>
    %9 = tpu.iota {dimensions = array<i32: 1>} : vector<16x128xi32>
    %c0_6 = arith.constant 0 : index
    %c0_7 = arith.constant 0 : index
    %10 = vector.load %arg3[%c0_6, %c0_7] : memref<16x1xi32, #tpu.memory_space<vmem>>, vector<16x1xi32>
    %c128_i32 = arith.constant 128 : i32
    %11 = arith.muli %arg1, %c128_i32 : i32
    %12 = vector.broadcast %11 : i32 to vector<16x1xi32>
    %13 = arith.subi %10, %12 : vector<16x1xi32>
    %cst_8 = arith.constant dense<0xFF800000> : vector<16xf32>
    %14 = vector.multi_reduction <maximumf>, %8, %cst_8 [1] : vector<16x128xf32> to vector<16xf32>
    %15 = vector.shape_cast %14 : vector<16xf32> to vector<16x1xf32>
    %c0_9 = arith.constant 0 : index
    %c0_10 = arith.constant 0 : index
    %16 = vector.load %arg8[%c0_9, %c0_10] : memref<16x1xf32, #tpu.memory_space<vmem>>, vector<16x1xf32>
    %17 = arith.maximumf %16, %15 : vector<16x1xf32>
    %18 = arith.subf %16, %17 : vector<16x1xf32>
    %19 = math.exp %18 : vector<16x1xf32>
    %c0_11 = arith.constant 0 : index
    %c0_12 = arith.constant 0 : index
    %20 = vector.load %arg9[%c0_11, %c0_12] : memref<16x1xf32, #tpu.memory_space<vmem>>, vector<16x1xf32>
    %21 = arith.mulf %19, %20 : vector<16x1xf32>
    %22 = vector.broadcast %17 : vector<16x1xf32> to vector<16x128xf32>
    %23 = arith.subf %8, %22 : vector<16x128xf32>
    %24 = math.exp %23 : vector<16x128xf32>
    %cst_13 = arith.constant dense<0.000000e+00> : vector<16xf32>
    %25 = vector.multi_reduction <add>, %24, %cst_13 [1] : vector<16x128xf32> to vector<16xf32>
    %26 = vector.shape_cast %25 : vector<16xf32> to vector<16x1xf32>
    %27 = arith.addf %21, %26 : vector<16x1xf32>
    %c0_14 = arith.constant 0 : index
    %c0_15 = arith.constant 0 : index
    %28 = vector.load %arg9[%c0_14, %c0_15] : memref<16x1xf32, #tpu.memory_space<vmem>>, vector<16x1xf32>
    tpu.vector_store %arg9[%c0_14, %c0_15], %27 {strides = array<i32>} : memref<16x1xf32, #tpu.memory_space<vmem>>, vector<16x1xf32>,
    %c0_16 = arith.constant 0 : index
    %c0_17 = arith.constant 0 : index
    %29 = vector.load %arg8[%c0_16, %c0_17] : memref<16x1xf32, #tpu.memory_space<vmem>>, vector<16x1xf32>
    tpu.vector_store %arg8[%c0_16, %c0_17], %17 {strides = array<i32>} : memref<16x1xf32, #tpu.memory_space<vmem>>, vector<16x1xf32>,
    %c0_18 = arith.constant 0 : index
    %c0_19 = arith.constant 0 : index
    %30 = vector.load %arg10[%c0_18, %c0_19] : memref<16x1xf32, #tpu.memory_space<vmem>>, vector<16x1xf32>
    %31 = vector.broadcast %13 : vector<16x1xi32> to vector<16x128xi32>
    %32 = arith.cmpi eq, %9, %31 : vector<16x128xi32>
    %cst_20 = arith.constant 0.000000e+00 : f32
    %33 = vector.broadcast %cst_20 : f32 to vector<16x128xf32>
    %34 = arith.select %32, %8, %33 : vector<16x128xi1>, vector<16x128xf32>
    %cst_21 = arith.constant dense<0.000000e+00> : vector<16xf32>
    %35 = vector.multi_reduction <add>, %34, %cst_21 [1] : vector<16x128xf32> to vector<16xf32>
    %36 = vector.shape_cast %35 : vector<16xf32> to vector<16x1xf32>
    %37 = arith.addf %30, %36 : vector<16x1xf32>
    %c0_22 = arith.constant 0 : index
    %c0_23 = arith.constant 0 : index
    %38 = vector.load %arg10[%c0_22, %c0_23] : memref<16x1xf32, #tpu.memory_space<vmem>>, vector<16x1xf32>
    tpu.vector_store %arg10[%c0_22, %c0_23], %37 {strides = array<i32>} : memref<16x1xf32, #tpu.memory_space<vmem>>, vector<16x1xf32>,
    %c1_i32 = arith.constant 1 : i32
    %39 = arith.cmpi eq, %arg1, %c1_i32 : i32
    %40 = arith.extui %39 : i1 to i32
    %c0_i32_24 = arith.constant 0 : i32
    %41 = arith.cmpi ne, %40, %c0_i32_24 : i32
    scf.if %41 {
      %c0_25 = arith.constant 0 : index
      %c0_26 = arith.constant 0 : index
      %42 = vector.load %arg8[%c0_25, %c0_26] : memref<16x1xf32, #tpu.memory_space<vmem>>, vector<16x1xf32>
      %c0_27 = arith.constant 0 : index
      %c0_28 = arith.constant 0 : index
      %43 = vector.load %arg9[%c0_27, %c0_28] : memref<16x1xf32, #tpu.memory_space<vmem>>, vector<16x1xf32>
      %44 = math.log %43 : vector<16x1xf32>
      %45 = arith.addf %42, %44 : vector<16x1xf32>
      %c0_29 = arith.constant 0 : index
      %c0_30 = arith.constant 0 : index
      %46 = vector.load %arg10[%c0_29, %c0_30] : memref<16x1xf32, #tpu.memory_space<vmem>>, vector<16x1xf32>
      %47 = arith.subf %45, %46 : vector<16x1xf32>
      %c0_31 = arith.constant 0 : index
      %c0_32 = arith.constant 0 : index
      %48 = vector.load %arg6[%c0_31, %c0_32] : memref<16x1xf32, #tpu.memory_space<vmem>>, vector<16x1xf32>
      tpu.vector_store %arg6[%c0_31, %c0_32], %47 {strides = array<i32>} : memref<16x1xf32, #tpu.memory_space<vmem>>, vector<16x1xf32>,
      %c0_33 = arith.constant 0 : index
      %c0_34 = arith.constant 0 : index
      %49 = vector.load %arg10[%c0_33, %c0_34] : memref<16x1xf32, #tpu.memory_space<vmem>>, vector<16x1xf32>
      %c0_35 = arith.constant 0 : index
      %c0_36 = arith.constant 0 : index
      %50 = vector.load %arg8[%c0_35, %c0_36] : memref<16x1xf32, #tpu.memory_space<vmem>>, vector<16x1xf32>
      %51 = arith.cmpf oge, %49, %50 : vector<16x1xf32>
      %52 = arith.extui %51 : vector<16x1xi1> to vector<16x1xi32>
      %53 = arith.sitofp %52 : vector<16x1xi32> to vector<16x1xf32>
      %c0_37 = arith.constant 0 : index
      %c0_38 = arith.constant 0 : index
      %54 = vector.load %arg7[%c0_37, %c0_38] : memref<16x1xf32, #tpu.memory_space<vmem>>, vector<16x1xf32>
      tpu.vector_store %arg7[%c0_37, %c0_38], %53 {strides = array<i32>} : memref<16x1xf32, #tpu.memory_space<vmem>>, vector<16x1xf32>,
    } else {
    }
    return
  }
  func.func @transform_0(%arg0: i32, %arg1: i32) -> (i32, i32) {
    %c0_i32 = arith.constant 0 : i32
    %c0_i32_0 = arith.constant 0 : i32
    return %arg0, %c0_i32 : i32, i32
  }
  func.func @transform_1(%arg0: i32, %arg1: i32) -> (i32, i32) {
    %c0_i32 = arith.constant 0 : i32
    %c0_i32_0 = arith.constant 0 : i32
    return %arg0, %c0_i32 : i32, i32
  }
  func.func @transform_2(%arg0: i32, %arg1: i32) -> (i32, i32) {
    %c0_i32 = arith.constant 0 : i32
    %c0_i32_0 = arith.constant 0 : i32
    return %arg1, %c0_i32 : i32, i32
  }
  func.func @transform_3(%arg0: i32, %arg1: i32) -> (i32, i32) {
    %c0_i32 = arith.constant 0 : i32
    %c0_i32_0 = arith.constant 0 : i32
    return %c0_i32, %arg1 : i32, i32
  }
  func.func @transform_4(%arg0: i32, %arg1: i32) -> (i32, i32) {
    %c0_i32 = arith.constant 0 : i32
    %c0_i32_0 = arith.constant 0 : i32
    return %arg0, %c0_i32 : i32, i32
  }
  func.func @transform_5(%arg0: i32, %arg1: i32) -> (i32, i32) {
    %c0_i32 = arith.constant 0 : i32
    %c0_i32_0 = arith.constant 0 : i32
    return %arg0, %c0_i32 : i32, i32
  }
}

</mosaic_0001>

<llo_original>
// kernel: tpu_custom_call.1
$region0: #{tpu_custom_call.1}
  #allocation0 [shape = 'u32[]', space=smem, size = 0x4, offset = 0x4, fixed_abs, tag = 'smem constant byte address 0x4 - core index']
  #allocation1 [shape = 'u32[144,128]{1,0:T(1,128)}', space=vmem, size = 0x12000, scoped, tag = 'internal scratch']
  #allocation2 [shape = 'f32[16,1]{1,0:T(8,128)}', space=vmem, size = 0x2000, scoped, tag = 'scratch operand']
  #allocation3 [shape = 'f32[16,1]{1,0:T(8,128)}', space=vmem, size = 0x2000, scoped, tag = 'scratch operand']
  #allocation4 [shape = 'f32[16,1]{1,0:T(8,128)}', space=vmem, size = 0x2000, scoped, tag = 'scratch operand']
  %s0 = inlined_call_operand.vmem [shape: bf16[32,128], index: 0, kind: input, shape index: {}]
  %s1 = inlined_call_operand.vmem [shape: s32[32,1], index: 1, kind: input, shape index: {}]
  %s2 = inlined_call_operand.hbm [shape: bf16[256,128], index: 2, kind: input, shape index: {}]
  %s3 = inlined_call_operand.vmem [shape: f32[1,256], index: 3, kind: input, shape index: {}]
  %s4 = inlined_call_operand.vmem [shape: f32[32,1], index: 4, kind: output, shape index: {0}]
  %s5 = inlined_call_operand.vmem [shape: f32[32,1], index: 5, kind: output, shape index: {1}]
  %6 = xla_tuple %s4, %s5
  %s7 = sld [smem:[#allocation0]]
  $region69: #{tpu_custom_call.1} parent=0
    _
  %s9 = ssub.s32 1, %s7
  %s10 = scalar_select 0, %s9, %s7
  $region1: #{tpu_custom_call.1} parent=0
    #allocation5 [shape = 'u8[65536]{0}', space=vmem, size = 0x10000, scoped, tag = 'input window, operand 2']
    #allocation6 [shape = 's32[2]{0}', space=sflag, size = 0x8, scoped, tag = 'scoped memory for tpu_custom_call.1']
    %11 = vsyncpa [#allocation6], 0
    %s12 = scalar_lea.sflag [#allocation6], 1
    %13 = vsyncpa %s12, 0
    loop: start=0, step=1, limit=6
    $region2: #{tpu_custom_call.1} parent=1 // loop_pre_header
      _
    $region3: #{tpu_custom_call.1} parent=1 // loop_header
      %s15 = sphi 0, %s19
      %p16 = scmp.ge.s32.totalorder %s15, 6
      %s22 = sphi 0, %s34
      %s23 = sphi 0, %s30
      %s24 = sphi 0, %s22
      %s25 = sphi 0, %s23
      %s26 = sphi 0, %s24
      %s27 = sphi 0, %s25
      %s37 = sphi 0, %s39
      %s40 = sphi 0, %s37
      %s41 = sphi 0, %s40
      %s57 = sphi 0, %s41
      %s63 = sphi 0, %s65
      %s66 = sphi 0, %s63
      %s67 = sphi 0, %s66
      %s83 = sphi 0, %s67
      %s89 = sphi 0, %s91
      %s92 = sphi 0, %s89
      %s93 = sphi 0, %s92
      %s109 = sphi 0, %s93
      %s115 = sphi 0, %s117
      %s118 = sphi 0, %s115
      %s119 = sphi 0, %s118
      %s135 = sphi 0, %s119
      %s141 = sphi 0, %s143
      %s144 = sphi 0, %s141
      %s145 = sphi 0, %s144
      %s161 = sphi 0, %s145
      %s167 = sphi 0, %s169
      %s170 = sphi 0, %s167
      %s171 = sphi 0, %s170
      %s187 = sphi 0, %s171
    $region4: #{tpu_custom_call.1} parent=1 // loop_header_branch
      %18 = sbr.rel (%p16) target = $region8
    $region5: #{tpu_custom_call.1} parent=1 // loop_body
      %s20 = ssub.s32 %s15, 1
      %s21 = ssub.s32 %s15, 2
      %s28 = sadd.s32 1, %s23
      %p29 = scmp.ge.s32.totalorder %s28, 2
      %s30 = scalar_select %p29, 0, %s28
      %s31 = sadd.s32 1, %s22
      %s32 = scalar_select %p29, %s31, %s22
      %p33 = scmp.ge.s32.totalorder %s32, 2
      %s34 = scalar_select %p33, 0, %s32
      %s35 = ssub.s32 %s22, %s34
      %p36 = scmp.eq.s32.totalorder %s35, 0
      %s38 = sadd.s32 %s37, 1
      %s39 = scalar_select %p36, %s37, %s38
      %p42 = pneg %p36
      %p43 = scmp.eq.s32.totalorder %s15, 3
      %p44 = por %p42, %p43
      %p45 = scmp.ne.s32.totalorder %s37, %s40
      %p46 = scmp.eq.s32.totalorder %s15, 0
      %p47 = por %p45, %p46
      %p48 = scmp.ne.s32.totalorder %s37, %s40
      %p49 = scmp.eq.s32.totalorder %s20, 3
      %p50 = por %p48, %p49
      %p51 = scmp.ne.s32.totalorder %s40, %s41
      %p52 = scmp.eq.s32.totalorder %s20, 0
      %p53 = por %p51, %p52
      %p54 = scmp.ne.s32.totalorder %s40, %s41
      %p55 = scmp.eq.s32.totalorder %s21, 3
      %p56 = por %p54, %p55
      %p58 = scmp.ne.s32.totalorder %s41, %s57
      %p59 = scmp.eq.s32.totalorder %s21, 0
      %p60 = por %p58, %p59
      %s61 = ssub.s32 %s22, %s34
      %p62 = scmp.eq.s32.totalorder %s61, 0
      %s64 = sadd.s32 %s63, 1
      %s65 = scalar_select %p62, %s63, %s64
      %p68 = pneg %p62
      %p69 = scmp.eq.s32.totalorder %s15, 3
      %p70 = por %p68, %p69
      %p71 = scmp.ne.s32.totalorder %s63, %s66
      %p72 = scmp.eq.s32.totalorder %s15, 0
      %p73 = por %p71, %p72
      %p74 = scmp.ne.s32.totalorder %s63, %s66
      %p75 = scmp.eq.s32.totalorder %s20, 3
      %p76 = por %p74, %p75
      %p77 = scmp.ne.s32.totalorder %s66, %s67
      %p78 = scmp.eq.s32.totalorder %s20, 0
      %p79 = por %p77, %p78
      %p80 = scmp.ne.s32.totalorder %s66, %s67
      %p81 = scmp.eq.s32.totalorder %s21, 3
      %p82 = por %p80, %p81
      %p84 = scmp.ne.s32.totalorder %s67, %s83
      %p85 = scmp.eq.s32.totalorder %s21, 0
      %p86 = por %p84, %p85
      %s87 = ssub.s32 %s23, %s30
      %p88 = scmp.eq.s32.totalorder %s87, 0
      %s90 = sadd.s32 %s89, 1
      %s91 = scalar_select %p88, %s89, %s90
      %p94 = pneg %p88
      %p95 = scmp.eq.s32.totalorder %s15, 3
      %p96 = por %p94, %p95
      %p97 = scmp.ne.s32.totalorder %s89, %s92
      %p98 = scmp.eq.s32.totalorder %s15, 0
      %p99 = por %p97, %p98
      %p100 = scmp.ne.s32.totalorder %s89, %s92
      %p101 = scmp.eq.s32.totalorder %s20, 3
      %p102 = por %p100, %p101
      %p103 = scmp.ne.s32.totalorder %s92, %s93
      %p104 = scmp.eq.s32.totalorder %s20, 0
      %p105 = por %p103, %p104
      %p106 = scmp.ne.s32.totalorder %s92, %s93
      %p107 = scmp.eq.s32.totalorder %s21, 3
      %p108 = por %p106, %p107
      %p110 = scmp.ne.s32.totalorder %s93, %s109
      %p111 = scmp.eq.s32.totalorder %s21, 0
      %p112 = por %p110, %p111
      %s113 = ssub.s32 %s23, %s30
      %p114 = scmp.eq.s32.totalorder %s113, 0
      %s116 = sadd.s32 %s115, 1
      %s117 = scalar_select %p114, %s115, %s116
      %p120 = pneg %p114
      %p121 = scmp.eq.s32.totalorder %s15, 3
      %p122 = por %p120, %p121
      %p123 = scmp.ne.s32.totalorder %s115, %s118
      %p124 = scmp.eq.s32.totalorder %s15, 0
      %p125 = por %p123, %p124
      %p126 = scmp.ne.s32.totalorder %s115, %s118
      %p127 = scmp.eq.s32.totalorder %s20, 3
      %p128 = por %p126, %p127
      %p129 = scmp.ne.s32.totalorder %s118, %s119
      %p130 = scmp.eq.s32.totalorder %s20, 0
      %p131 = por %p129, %p130
      %p132 = scmp.ne.s32.totalorder %s118, %s119
      %p133 = scmp.eq.s32.totalorder %s21, 3
      %p134 = por %p132, %p133
      %p136 = scmp.ne.s32.totalorder %s119, %s135
      %p137 = scmp.eq.s32.totalorder %s21, 0
      %p138 = por %p136, %p137
      %s139 = ssub.s32 %s22, %s34
      %p140 = scmp.eq.s32.totalorder %s139, 0
      %s142 = sadd.s32 %s141, 1
      %s143 = scalar_select %p140, %s141, %s142
      %p146 = pneg %p140
      %p147 = scmp.eq.s32.totalorder %s15, 3
      %p148 = por %p146, %p147
      %p149 = scmp.ne.s32.totalorder %s141, %s144
      %p150 = scmp.eq.s32.totalorder %s15, 0
      %p151 = por %p149, %p150
      %p152 = scmp.ne.s32.totalorder %s141, %s144
      %p153 = scmp.eq.s32.totalorder %s20, 3
      %p154 = por %p152, %p153
      %p155 = scmp.ne.s32.totalorder %s144, %s145
      %p156 = scmp.eq.s32.totalorder %s20, 0
      %p157 = por %p155, %p156
      %p158 = scmp.ne.s32.totalorder %s144, %s145
      %p159 = scmp.eq.s32.totalorder %s21, 3
      %p160 = por %p158, %p159
      %p162 = scmp.ne.s32.totalorder %s145, %s161
      %p163 = scmp.eq.s32.totalorder %s21, 0
      %p164 = por %p162, %p163
      %s165 = ssub.s32 %s22, %s34
      %p166 = scmp.eq.s32.totalorder %s165, 0
      %s168 = sadd.s32 %s167, 1
      %s169 = scalar_select %p166, %s167, %s168
      %p172 = pneg %p166
      %p173 = scmp.eq.s32.totalorder %s15, 3
      %p174 = por %p172, %p173
      %p175 = scmp.ne.s32.totalorder %s167, %s170
      %p176 = scmp.eq.s32.totalorder %s15, 0
      %p177 = por %p175, %p176
      %p178 = scmp.ne.s32.totalorder %s167, %s170
      %p179 = scmp.eq.s32.totalorder %s20, 3
      %p180 = por %p178, %p179
      %p181 = scmp.ne.s32.totalorder %s170, %s171
      %p182 = scmp.eq.s32.totalorder %s20, 0
      %p183 = por %p181, %p182
      %p184 = scmp.ne.s32.totalorder %s170, %s171
      %p185 = scmp.eq.s32.totalorder %s21, 3
      %p186 = por %p184, %p185
      %p188 = scmp.ne.s32.totalorder %s171, %s187
      %p189 = scmp.eq.s32.totalorder %s21, 0
      %p190 = por %p188, %p189
      %p191 = scmp.le.s32.totalorder 1, %s15
      %p192 = scmp.lt.s32.totalorder %s15, 5
      %p193 = pnand %p191, %p192
      %p194 = pneg %p193
      // Predicated region
      $region9: #{tpu_custom_call.1} parent=5 // pred_check
        _
      $region10: #{tpu_custom_call.1} parent=5 // pred_check_branch
        %196 = sbr.rel (%p193) target = $region12
      $region11: #{tpu_custom_call.1} parent=5 // pred_region
        %s197 = ssub.s32 %s15, 1
      $region12: #{tpu_custom_call.1} parent=5 // pred_fallthru
        _
      %p198 = scmp.lt.s32.totalorder %s15, 4
      // Predicated region
      $region13: #{tpu_custom_call.1} parent=5 // pred_check
        %p199 = pneg %p198
      $region14: #{tpu_custom_call.1} parent=5 // pred_check_branch
        %201 = sbr.rel (%p199) target = $region16
      $region15: #{tpu_custom_call.1} parent=5 // pred_region
        // Predicated region
        $region17: #{tpu_custom_call.1} parent=15 // pred_check
          %p202 = pneg %p47
        $region18: #{tpu_custom_call.1} parent=15 // pred_check_branch
          %204 = sbr.rel (%p202) target = $region20
        $region19: #{tpu_custom_call.1} parent=15 // pred_region
          %s205 = smul.u32 2, %s22
          %p206 = scmp.lt.s32.totalorder %s205, 3
          %s207 = scalar_select %p206, %s205, 3
          %s208 = smul.addr %s207, 4
          %s209 = scalar_lea.vmem %s0, %s208
          %s210 = smul.u32 2, %s22
        $region20: #{tpu_custom_call.1} parent=15 // pred_fallthru
          _
        // Predicated region
        $region21: #{tpu_custom_call.1} parent=15 // pred_check
          %p211 = pneg %p73
        $region22: #{tpu_custom_call.1} parent=15 // pred_check_branch
          %213 = sbr.rel (%p211) target = $region24
        $region23: #{tpu_custom_call.1} parent=15 // pred_region
          %s214 = smul.u32 2, %s22
          %p215 = scmp.lt.s32.totalorder %s214, 3
          %s216 = scalar_select %p215, %s214, 3
          %s217 = smul.addr %s216, 8
          %s218 = scalar_lea.vmem %s1, %s217
          %s219 = smul.u32 2, %s22
        $region24: #{tpu_custom_call.1} parent=15 // pred_fallthru
          _
        // Predicated region
        $region25: #{tpu_custom_call.1} parent=15 // pred_check
          %p220 = pneg %p99
        $region26: #{tpu_custom_call.1} parent=15 // pred_check_branch
          %222 = sbr.rel (%p220) target = $region28
        $region27: #{tpu_custom_call.1} parent=15 // pred_region
          %s223 = sand.u32 %s89, 1
          %s224 = scalar_lea.sflag [#allocation6], %s223
          %s225 = sand.u32 %s89, 1
          %s226 = smul.addr %s225, 64
          %s227 = scalar_lea.vmem [#allocation5], %s226
          %s228 = smul.u32 16, %s23
          %s230 = ssub.s32 1024, 1024
          %231 = vsyncadd %s224, %s230
          %s232 = smul.addr %s228, 64
          %s233 = scalar_lea.hbm %s2, %s232
          %s234 = sshll.u32 %s227, 4
          %s235 = int_to_ptr.vmem [resolvable:$true] %s234
          %240 = dma.hbm_to_vmem [thread:$0]  %s233, 1024, %s235, %s224, 64, 64, 4
        $region28: #{tpu_custom_call.1} parent=15 // pred_fallthru
          _
        // Predicated region
        $region29: #{tpu_custom_call.1} parent=15 // pred_check
          %p241 = pneg %p125
        $region30: #{tpu_custom_call.1} parent=15 // pred_check_branch
          %243 = sbr.rel (%p241) target = $region32
        $region31: #{tpu_custom_call.1} parent=15 // pred_region
          %p244 = scmp.lt.s32.totalorder %s23, 1
          %s245 = scalar_select %p244, %s23, 1
          %s246 = scalar_lea.vmem %s3, %s245
        $region32: #{tpu_custom_call.1} parent=15 // pred_fallthru
          _
      $region16: #{tpu_custom_call.1} parent=5 // pred_fallthru
        _
      %p247 = scmp.le.s32.totalorder 1, %s15
      %p248 = scmp.lt.s32.totalorder %s15, 5
      %p249 = pnand %p247, %p248
      %p250 = pneg %p249
      // Predicated region
      $region33: #{tpu_custom_call.1} parent=5 // pred_check
        _
      $region34: #{tpu_custom_call.1} parent=5 // pred_check_branch
        %252 = sbr.rel (%p249) target = $region36
      $region35: #{tpu_custom_call.1} parent=5 // pred_region
        %s253 = ssub.s32 %s15, 1
        %s254 = sand.u32 %s92, 1
        %s255 = scalar_lea.sflag [#allocation6], %s254
        %s256 = sand.u32 %s92, 1
        %s257 = smul.addr %s256, 64
        %s258 = scalar_lea.vmem [#allocation5], %s257
        // Predicated region
        $region37: #{tpu_custom_call.1} parent=35 // pred_check
          %p259 = pneg %p105
        $region38: #{tpu_custom_call.1} parent=35 // pred_check_branch
          %261 = sbr.rel (%p259) target = $region40
        $region39: #{tpu_custom_call.1} parent=35 // pred_region
          %262 = dma.done %s255, 1024
        $region40: #{tpu_custom_call.1} parent=35 // pred_fallthru
          _
        %s263 = smul.u32 2, %s24
        %p264 = scmp.lt.s32.totalorder %s263, 3
        %s265 = scalar_select %p264, %s263, 3
        %s266 = smul.addr %s265, 4
        %s267 = scalar_lea.vmem %s0, %s266
        %p268 = pneg %p53
        %p269 = pneg %p50
        %s270 = smul.u32 2, %s24
        %p271 = scmp.lt.s32.totalorder %s270, 3
        %s272 = scalar_select %p271, %s270, 3
        %s273 = smul.addr %s272, 8
        %s274 = scalar_lea.vmem %s1, %s273
        %p275 = pneg %p79
        %p276 = pneg %p76
        %s277 = sand.u32 %s92, 1
        %s278 = scalar_lea.sflag [#allocation6], %s277
        %s279 = sand.u32 %s92, 1
        %s280 = smul.addr %s279, 64
        %s281 = scalar_lea.vmem [#allocation5], %s280
        %p282 = pneg %p105
        %p283 = pneg %p102
        %p284 = scmp.lt.s32.totalorder %s25, 1
        %s285 = scalar_select %p284, %s25, 1
        %s286 = scalar_lea.vmem %s3, %s285
        %p287 = pneg %p131
        %p288 = pneg %p128
        %p289 = pneg %p157
        %p290 = pneg %p154
        %s291 = smul.u32 2, %s24
        %p292 = scmp.lt.s32.totalorder %s291, 3
        %s293 = scalar_select %p292, %s291, 3
        %s294 = smul.addr %s293, 8
        %s295 = scalar_lea.vmem %s4, %s294
        %p296 = pneg %p183
        %p297 = pneg %p180
        %s298 = smul.u32 2, %s24
        %p299 = scmp.lt.s32.totalorder %s298, 3
        %s300 = scalar_select %p299, %s298, 3
        %s301 = smul.addr %s300, 8
        %s302 = scalar_lea.vmem %s5, %s301
        %s303 = smul.u32 2, %s24
        %p304 = scmp.lt.s32.totalorder %s303, 3
        %s305 = scalar_select %p304, %s303, 3
        %s306 = smul.addr %s305, 4
        %s307 = scalar_lea.vmem %s0, %s306
        %s308 = smul.u32 2, %s24
        %s309 = smul.u32 2, %s24
        %p310 = scmp.lt.s32.totalorder %s309, 3
        %s311 = scalar_select %p310, %s309, 3
        %s312 = smul.addr %s311, 8
        %s313 = scalar_lea.vmem %s1, %s312
        %s314 = smul.u32 2, %s24
        %s315 = smul.u32 16, %s25
        %p316 = scmp.lt.s32.totalorder %s25, 1
        %s317 = scalar_select %p316, %s25, 1
        %s318 = scalar_lea.vmem %s3, %s317
        %s319 = smul.u32 2, %s24
        %p320 = scmp.lt.s32.totalorder %s319, 3
        %s321 = scalar_select %p320, %s319, 3
        %s322 = smul.addr %s321, 8
        %s323 = scalar_lea.vmem %s4, %s322
        %s324 = smul.u32 2, %s24
        %s325 = smul.u32 2, %s24
        %p326 = scmp.lt.s32.totalorder %s325, 3
        %s327 = scalar_select %p326, %s325, 3
        %s328 = smul.addr %s327, 8
        %s329 = scalar_lea.vmem %s5, %s328
        %s330 = smul.u32 2, %s24
        %p332 = scmp.eq.s32.totalorder %s25, 0
        // Predicated region
        $region41: #{tpu_custom_call.1} parent=35 // pred_check
          %p333 = pneg %p332
        $region42: #{tpu_custom_call.1} parent=35 // pred_check_branch
          %335 = sbr.rel (%p333) target = $region44
        $region43: #{tpu_custom_call.1} parent=35 // pred_region
          %vm336 = vcmask 7168
          %337 = vst.msk [vmem:[#allocation2] sm:$0xff] %vm336, -inf
          %338 = vst.msk [vmem:[#allocation2 + $0x8] sm:$0xff] %vm336, -inf
          %339 = vst.msk [vmem:[#allocation3] sm:$0xff] %vm336, 0.0
          %340 = vst.msk [vmem:[#allocation3 + $0x8] sm:$0xff] %vm336, 0.0
          %341 = vst.msk [vmem:[#allocation4] sm:$0xff] %vm336, 0.0
          %342 = vst.msk [vmem:[#allocation4 + $0x8] sm:$0xff] %vm336, 0.0
        $region44: #{tpu_custom_call.1} parent=35 // pred_fallthru
          _
        %v343 = vld [vmem:[%s307] sm:$0xf]
        %v344 = vld [vmem:[%s307 + $0x4] sm:$0xf]
        %v345 = vld [vmem:[%s258] sm:$0xf]
        %v346 = vld [vmem:[%s258 + $0x4] sm:$0xf]
        %v347 = vld [vmem:[%s258 + $0x8] sm:$0xf]
        %v348 = vld [vmem:[%s258 + $0xc] sm:$0xf]
        %v349 = vld [vmem:[%s258 + $0x10] sm:$0xf]
        %v350 = vld [vmem:[%s258 + $0x14] sm:$0xf]
        %v351 = vld [vmem:[%s258 + $0x18] sm:$0xf]
        %v352 = vld [vmem:[%s258 + $0x1c] sm:$0xf]
        %v353 = vld [vmem:[%s258 + $0x20] sm:$0xf]
        %v354 = vld [vmem:[%s258 + $0x24] sm:$0xf]
        %v355 = vld [vmem:[%s258 + $0x28] sm:$0xf]
        %v356 = vld [vmem:[%s258 + $0x2c] sm:$0xf]
        %v357 = vld [vmem:[%s258 + $0x30] sm:$0xf]
        %v358 = vld [vmem:[%s258 + $0x34] sm:$0xf]
        %v359 = vld [vmem:[%s258 + $0x38] sm:$0xf]
        %v360 = vld [vmem:[%s258 + $0x3c] sm:$0xf]
        %v361 = vld [vmem:[%s318] sm:$0x1]
        %v363 = vlaneseq
        %v364 = vshrl.u32 %v363, 7
        %v365 = vsub.s32 0, %v364
        %v366 = vrot.slane %v361, %v365
        %v370 = vunpack.c.l.b16 %v343
        %v371 = vunpack.c.l.b16 %v344
        %v372 = vpack.c.b16 %v371, %v370
        %v390 = vunpack.c.l.b16 %v345
        %v391 = vunpack.c.l.b16 %v346
        %v392 = vunpack.c.l.b16 %v347
        %v393 = vunpack.c.l.b16 %v348
        %v394 = vunpack.c.l.b16 %v349
        %v395 = vunpack.c.l.b16 %v350
        %v396 = vunpack.c.l.b16 %v351
        %v397 = vunpack.c.l.b16 %v352
        %v398 = vunpack.c.l.b16 %v353
        %v399 = vunpack.c.l.b16 %v354
        %v400 = vunpack.c.l.b16 %v355
        %v401 = vunpack.c.l.b16 %v356
        %v402 = vunpack.c.l.b16 %v357
        %v403 = vunpack.c.l.b16 %v358
        %v404 = vunpack.c.l.b16 %v359
        %v405 = vunpack.c.l.b16 %v360
        %v406 = vpack.c.b16 %v391, %v390
        %v407 = vpack.c.b16 %v393, %v392
        %v408 = vpack.c.b16 %v395, %v394
        %v409 = vpack.c.b16 %v397, %v396
        %v410 = vpack.c.b16 %v399, %v398
        %v411 = vpack.c.b16 %v401, %v400
        %v412 = vpack.c.b16 %v403, %v402
        %v413 = vpack.c.b16 %v405, %v404
        %422 = vmatprep.subr.bf16.mxu0 0
        %423 = vmatpush1.bf16.xpose.msra.mxu0 %v406
        %424 = vmatprep.subr.bf16.mxu0 0
        %425 = vmatpush1.bf16.xpose.msra.mxu0 %v407
        %426 = vmatprep.subr.bf16.mxu0 0
        %427 = vmatpush1.bf16.xpose.msra.mxu0 %v408
        %428 = vmatprep.subr.bf16.mxu0 0
        %429 = vmatpush1.bf16.xpose.msra.mxu0 %v409
        %430 = vmatprep.subr.bf16.mxu0 0
        %431 = vmatpush1.bf16.xpose.msra.mxu0 %v410
        %432 = vmatprep.subr.bf16.mxu0 0
        %433 = vmatpush1.bf16.xpose.msra.mxu0 %v411
        %434 = vmatprep.subr.bf16.mxu0 0
        %435 = vmatpush1.bf16.xpose.msra.mxu0 %v412
        %436 = vmatprep.subr.bf16.mxu0 0
        %437 = vmatpush1.bf16.xpose.msra.mxu0 %v413
        %438 = vmatprep.subr.bf16.mxu0 0
        %439 = vmatpush1.bf16.xpose.msra.mxu0 0
        %440 = vmatprep.subr.bf16.mxu0 0
        %441 = vmatpush1.bf16.xpose.msra.mxu0 0
        %442 = vmatprep.subr.bf16.mxu0 0
        %443 = vmatpush1.bf16.xpose.msra.mxu0 0
        %444 = vmatprep.subr.bf16.mxu0 0
        %445 = vmatpush1.bf16.xpose.msra.mxu0 0
        %446 = vmatprep.subr.bf16.mxu0 0
        %447 = vmatpush1.bf16.xpose.msra.mxu0 0
        %448 = vmatprep.subr.bf16.mxu0 0
        %449 = vmatpush1.bf16.xpose.msra.mxu0 0
        %450 = vmatprep.subr.bf16.mxu0 0
        %451 = vmatpush1.bf16.xpose.msra.mxu0 0
        %452 = vmatprep.subr.bf16.mxu0 0
        %453 = vmatpush1.bf16.xpose.msra.mxu0 0
        %454 = vmatprep.mubr.bf16.mxu0 0
        %455 = vmatmul.mubr.bf16.gmra.mrb[0].mxu0 %v372
        %v456 = vpop.f32.mrb[0].mxu0
        %v457 = vadd.f32 %v366, %v456
        %v458 = vpop.f32.mrb[0].mxu0
        %v459 = vpop.f32.mrb[0].mxu0
        %v460 = vadd.f32 %v366, %v459
        %v461 = vpop.f32.mrb[0].mxu0
        %462 = vdwg.mxu0
        %v463 = vlaneseq
        %v464 = vand.u32 %v463, 127
        %v465 = vld [vmem:[%s313] sm:$0xff]
        %v466 = vld [vmem:[%s313 + $0x8] sm:$0xff]
        %s467 = smul.u32 %s25, 128
        %v468 = vstv %s467
        %v469 = vsub.s32 %v465, %v468
        %v470 = vsub.s32 %v466, %v468
        %471 = vmax.xlane.f32.xlu0 %v457
        %v472 = vpop.xlane.xlu0 %471
        %473 = vmax.xlane.f32.xlu0 %v460
        %v474 = vpop.xlane.xlu0 %473
        %v475 = vld [vmem:[#allocation2] sm:$0xff]
        %v476 = vld [vmem:[#allocation2 + $0x8] sm:$0xff]
        %v477 = vmax.f32 %v475, %v472
        %v478 = vmax.f32 %v476, %v474
        %v479 = vsub.f32 %v475, %v477
        %v480 = vsub.f32 %v476, %v478
        %v481 = vmul.f32 %v479, 1.442695
        %v482 = vpow.pop %v481
        %v483 = vmul.f32 %v480, 1.442695
        %v484 = vpow.pop %v483
        %v485 = vld [vmem:[#allocation3] sm:$0xff]
        %v486 = vld [vmem:[#allocation3 + $0x8] sm:$0xff]
        %v487 = vmul.f32 %v482, %v485
        %v488 = vmul.f32 %v484, %v486
        %490 = vset.pattern.permute.xlu0 0
        %491 = vperm.xlu0 %490, %v477
        %v492 = vpop.permute.xlu0 %491
        %495 = vset.pattern.permute.xlu0 0
        %496 = vperm.xlu0 %495, %v478
        %v497 = vpop.permute.xlu0 %496
        %v499 = vsub.f32 %v457, %v492
        %v500 = vsub.f32 %v460, %v497
        %v501 = vmul.f32 %v499, 1.442695
        %v502 = vpow.pop %v501
        %v503 = vmul.f32 %v500, 1.442695
        %v504 = vpow.pop %v503
        %505 = vadd.xlane.f32.xlu0 %v502
        %v506 = vpop.xlane.xlu0 %505
        %507 = vadd.xlane.f32.xlu0 %v504
        %v508 = vpop.xlane.xlu0 %507
        %v509 = vadd.f32 %v487, %v506
        %v510 = vadd.f32 %v488, %v508
        %vm511 = vcmask 7168
        %512 = vst.msk [vmem:[#allocation3] sm:$0xff] %vm511, %v509
        %513 = vst.msk [vmem:[#allocation3 + $0x8] sm:$0xff] %vm511, %v510
        %514 = vst.msk [vmem:[#allocation2] sm:$0xff] %vm511, %v477
        %515 = vst.msk [vmem:[#allocation2 + $0x8] sm:$0xff] %vm511, %v478
        %v516 = vld [vmem:[#allocation4] sm:$0xff]
        %v517 = vld [vmem:[#allocation4 + $0x8] sm:$0xff]
        %518 = vset.pattern.permute.xlu0 0
        %519 = vperm.xlu0 %518, %v469
        %v520 = vpop.permute.xlu0 %519
        %521 = vset.pattern.permute.xlu0 0
        %522 = vperm.xlu0 %521, %v470
        %v523 = vpop.permute.xlu0 %522
        %vm524 = vcmp.eq.s32.totalorder %v464, %v520
        %vm525 = vcmp.eq.s32.totalorder %v464, %v523
        %v526 = vsel %vm524, %v457, 0.0
        %v527 = vsel %vm525, %v460, 0.0
        %528 = vadd.xlane.f32.xlu0 %v526
        %v529 = vpop.xlane.xlu0 %528
        %530 = vadd.xlane.f32.xlu0 %v527
        %v531 = vpop.xlane.xlu0 %530
        %v532 = vadd.f32 %v516, %v529
        %v533 = vadd.f32 %v517, %v531
        %534 = vst.msk [vmem:[#allocation4] sm:$0xff] %vm511, %v532
        %535 = vst.msk [vmem:[#allocation4 + $0x8] sm:$0xff] %vm511, %v533
        %p536 = scmp.eq.s32.totalorder %s25, 1
        // Predicated region
        $region45: #{tpu_custom_call.1} parent=35 // pred_check
          %p537 = pneg %p536
        $region46: #{tpu_custom_call.1} parent=35 // pred_check_branch
          %539 = sbr.rel (%p537) target = $region48
        $region47: #{tpu_custom_call.1} parent=35 // pred_region
          %v540 = vld [vmem:[#allocation2] sm:$0xff]
          %v541 = vld [vmem:[#allocation2 + $0x8] sm:$0xff]
          %v542 = vld [vmem:[#allocation3] sm:$0xff]
          %v543 = vld [vmem:[#allocation3 + $0x8] sm:$0xff]
          %v544 = vlog2.pop %v542
          %v545 = vmul.f32 %v544, 0.6931472
          %v546 = vlog2.pop %v543
          %v547 = vmul.f32 %v546, 0.6931472
          %v548 = vadd.f32 %v540, %v545
          %v549 = vadd.f32 %v541, %v547
          %v550 = vld [vmem:[#allocation4] sm:$0xff]
          %v551 = vld [vmem:[#allocation4 + $0x8] sm:$0xff]
          %v552 = vsub.f32 %v548, %v550
          %v553 = vsub.f32 %v549, %v551
          %554 = vst.msk [vmem:[%s323] sm:$0xff] %vm511, %v552
          %555 = vst.msk [vmem:[%s323 + $0x8] sm:$0xff] %vm511, %v553
          %v556 = vld [vmem:[#allocation4] sm:$0xff]
          %v557 = vld [vmem:[#allocation4 + $0x8] sm:$0xff]
          %v558 = vld [vmem:[#allocation2] sm:$0xff]
          %v559 = vld [vmem:[#allocation2 + $0x8] sm:$0xff]
          %vm560 = vcmp.ge.f32.partialorder %v556, %v558
          %vm561 = vcmp.ge.f32.partialorder %v557, %v559
          %v562 = vsel %vm560, 1, 0
          %v563 = vsel %vm561, 1, 0
          %v564 = vcvt.s32.f32 %v562
          %v565 = vcvt.s32.f32 %v563
          %566 = vst.msk [vmem:[%s329] sm:$0xff] %vm511, %v564
          %567 = vst.msk [vmem:[%s329 + $0x8] sm:$0xff] %vm511, %v565
        $region48: #{tpu_custom_call.1} parent=35 // pred_fallthru
          _
        %s568 = smul.u32 2, %s24
        %p569 = scmp.lt.s32.totalorder %s568, 3
        %s570 = scalar_select %p569, %s568, 3
        %s571 = smul.addr %s570, 8
        %s572 = scalar_lea.vmem %s4, %s571
        %s573 = smul.u32 2, %s24
        %p574 = scmp.lt.s32.totalorder %s573, 3
        %s575 = scalar_select %p574, %s573, 3
        %s576 = smul.addr %s575, 8
        %s577 = scalar_lea.vmem %s5, %s576
        // Predicated region
        $region49: #{tpu_custom_call.1} parent=35 // pred_check
          %p578 = pneg %p154
        $region50: #{tpu_custom_call.1} parent=35 // pred_check_branch
          %580 = sbr.rel (%p578) target = $region52
        $region51: #{tpu_custom_call.1} parent=35 // pred_region
          %s581 = smul.u32 2, %s24
        $region52: #{tpu_custom_call.1} parent=35 // pred_fallthru
          _
        // Predicated region
        $region53: #{tpu_custom_call.1} parent=35 // pred_check
          %p582 = pneg %p180
        $region54: #{tpu_custom_call.1} parent=35 // pred_check_branch
          %584 = sbr.rel (%p582) target = $region56
        $region55: #{tpu_custom_call.1} parent=35 // pred_region
          %s585 = smul.u32 2, %s24
        $region56: #{tpu_custom_call.1} parent=35 // pred_fallthru
          _
      $region36: #{tpu_custom_call.1} parent=5 // pred_fallthru
        _
      %p586 = scmp.le.s32.totalorder 2, %s15
      // Predicated region
      $region57: #{tpu_custom_call.1} parent=5 // pred_check
        %p587 = pneg %p586
      $region58: #{tpu_custom_call.1} parent=5 // pred_check_branch
        %589 = sbr.rel (%p587) target = $region60
      $region59: #{tpu_custom_call.1} parent=5 // pred_region
        %s590 = ssub.s32 %s15, 2
        // Predicated region
        $region61: #{tpu_custom_call.1} parent=59 // pred_check
          %p591 = pneg %p160
        $region62: #{tpu_custom_call.1} parent=59 // pred_check_branch
          %593 = sbr.rel (%p591) target = $region64
        $region63: #{tpu_custom_call.1} parent=59 // pred_region
          %s594 = smul.u32 2, %s26
          %p595 = scmp.lt.s32.totalorder %s594, 3
          %s596 = scalar_select %p595, %s594, 3
          %s597 = smul.addr %s596, 8
          %s598 = scalar_lea.vmem %s4, %s597
        $region64: #{tpu_custom_call.1} parent=59 // pred_fallthru
          _
        // Predicated region
        $region65: #{tpu_custom_call.1} parent=59 // pred_check
          %p599 = pneg %p186
        $region66: #{tpu_custom_call.1} parent=59 // pred_check_branch
          %601 = sbr.rel (%p599) target = $region68
        $region67: #{tpu_custom_call.1} parent=59 // pred_region
          %s602 = smul.u32 2, %s26
          %p603 = scmp.lt.s32.totalorder %s602, 3
          %s604 = scalar_select %p603, %s602, 3
          %s605 = smul.addr %s604, 8
          %s606 = scalar_lea.vmem %s5, %s605
        $region68: #{tpu_custom_call.1} parent=59 // pred_fallthru
          _
      $region60: #{tpu_custom_call.1} parent=5 // pred_fallthru
        _
    $region6: #{tpu_custom_call.1} parent=1 // loop_footer
      %s19 = sadd.s32 1, %s15
    $region7: #{tpu_custom_call.1} parent=1 // loop_footer_branch
      %14 = sbr.rel target = $region3
    $region8: #{tpu_custom_call.1} parent=1 // loop_exit
      _
    %607 = vsyncpa [#allocation6], 1
    %s608 = scalar_lea.sflag [#allocation6], 1
    %609 = vsyncpa %s608, 1

</llo_original>
